<compile_context>
chip_gen: v7x
topology: tpu7x:2x2x1
jax: 0.10.0
libtpu: 0.0.40
codegen_flags: <defaults>
</compile_context>

<pallas_src>
import jax
import jax.numpy as jnp
from jax import lax
from jax.experimental import pallas as pl
from jax.experimental.pallas import tpu as pltpu

STATE_DIM = 16
ACTION_DIM = 4
HIDDEN_DIM = 32
LATENT_DIM = 8
BATCH = 8

FUSED_COLS = 4 * HIDDEN_DIM      # 128: [enc/dec block | seq | rew | con]
OUT_COLS = 128                   # lane-dense output slab width

# --- w_main row offsets ------------------------------------------------------
R_WS = 0        # (16,128) state  -> [enc L1 | seq L1 | rew L1 | con L1]
R_WZ = 16       # ( 8,128) z      -> [dec L1 | seq L1 | rew L1 | con L1]
R_WA = 24       # ( 4,128) action -> [   0   | seq L1 |   0    |   0   ]
R_WHD = 32      # (32,128) dec_h2 -> head cols [dec logits 0:16]
R_WHS = 64      # (96,128) src_h  -> head cols [next 16:32 | rew 32 | con 33]
R_BIAS = 160    # ( 4,128) bias rows, see below
W_MAIN_ROWS = 168

# bias row indices inside the (4,128) bias band
B_SA, B_MID, B_MISC, B_HEAD = 0, 1, 2, 3

# w_mid leading indices
M_ENC2, M_DEC2, M_DYN1, M_DYN2, M_ENCH, M_DYNH = 0, 1, 2, 3, 4, 5

# output slab column offsets
O_NEXT, O_DEC, O_MU, O_STD, O_MUN, O_STDN, O_REW, O_CON = 0, 16, 32, 40, 48, 56, 64, 65


def _mm(a, w):
    """MXU matmul: bf16 operands (cast at the MXU boundary only), f32 accum."""
    return jnp.dot(a.astype(jnp.bfloat16), w.astype(jnp.bfloat16),
                   preferred_element_type=jnp.float32)


def simulator_kernel(state_ref, action_ref, eps_ref, w_main_ref, w_mid_ref,
                     out_ref):
    f32 = jnp.float32
    S, A, H, L = STATE_DIM, ACTION_DIM, HIDDEN_DIM, LATENT_DIM
    B = state_ref.shape[0]

    # one (4,128) load for all bias rows, then sublane slices in vreg space
    bias = w_main_ref[R_BIAS:R_BIAS + 4, :]
    b_sa = bias[B_SA:B_SA + 1, :]        # [enc_b1 | seq_b1 | rew_b1 | con_b1]
    b_mid = bias[B_MID:B_MID + 1, :]     # [enc_b2 | dec_b2 | dyn_b1 | dyn_b2]
    b_misc = bias[B_MISC:B_MISC + 1, :]  # [dec_b1 | enc_head_b,0 | dyn_head_b,0 | 0]
    b_head = bias[B_HEAD:B_HEAD + 1, :]  # [dec_b3 | seq_b2 | rew_b2 | con_b2 | 0]

    # --- fused first layers over state / action (two independent matmuls,
    #     biases added from the slab: no ones column, no in-kernel concat) ---
    sa_pre = (_mm(state_ref[...], w_main_ref[R_WS:R_WS + S, :])
              + _mm(action_ref[...], w_main_ref[R_WA:R_WA + A, :])
              + b_sa)                                            # (B,128)

    # --- EncoderModel ---
    enc_h1 = jnp.maximum(sa_pre[:, 0:H], 0.0)
    enc_h2 = jnp.maximum(_mm(enc_h1, w_mid_ref[M_ENC2]) + b_mid[:, 0:H], 0.0)
    enc_head = _mm(enc_h2, w_mid_ref[M_ENCH]) + b_misc[:, H:2 * H]   # (B,32)
    mu = enc_head[:, 0:L]
    logvar = enc_head[:, L:2 * L]
    std = jnp.exp(0.5 * logvar)
    z = mu + std * eps_ref[...]                     # posterior_dist.rsample()

    # --- fused z consumers: [dec L1 | seq L1 (z) | rew L1 (z) | con L1 (z)] ---
    z_pre = _mm(z, w_main_ref[R_WZ:R_WZ + L, :])                 # (B,128)

    dec_h1 = jnp.maximum(z_pre[:, 0:H] + b_misc[:, 0:H], 0.0)
    src_h = jnp.maximum(sa_pre[:, H:FUSED_COLS] + z_pre[:, H:FUSED_COLS], 0.0)

    # --- DecoderModel second layer ---
    dec_h2 = jnp.maximum(_mm(dec_h1, w_mid_ref[M_DEC2]) + b_mid[:, H:2 * H], 0.0)

    # --- fused output heads: two independent matmuls (no concat on the
    #     critical path); only columns 0:34 of the 128-wide result are used ---
    head_out = (_mm(dec_h2, w_main_ref[R_WHD:R_WHD + H, :])
                + _mm(src_h, w_main_ref[R_WHS:R_WHS + 3 * H, :])
                + b_head)                                        # (B,128)
    decoder_logits = head_out[:, 0:S]
    state_next_logits = head_out[:, S:2 * S]
    rewcon = head_out[:, 2 * S:2 * S + 2]           # [reward | continue]

    # --- straight-through sample: forward value == one_hot(argmax(logits))
    #     (softmax is monotonic; probs - probs.detach() cancels in forward) ---
    iota16 = lax.broadcasted_iota(jnp.int32, (B, S), 1)
    mx = jnp.max(state_next_logits, axis=-1, keepdims=True)
    idx = jnp.min(jnp.where(state_next_logits >= mx, iota16, S),
                  axis=-1, keepdims=True)           # first argmax, (B,1)
    # 32-lane one-hot: lanes >= S never match (idx < S), so the dynamics-L1
    # matmul uses the full (32,32) block with no row slicing.
    iota32 = lax.broadcasted_iota(jnp.int32, (B, 2 * S), 1)
    one_hot = (iota32 == idx).astype(f32)

    # --- DynamicsModel on the sampled next state ---
    dyn_h1 = jnp.maximum(_mm(one_hot, w_mid_ref[M_DYN1]) + b_mid[:, 2 * H:3 * H], 0.0)
    dyn_h2 = jnp.maximum(_mm(dyn_h1, w_mid_ref[M_DYN2]) + b_mid[:, 3 * H:4 * H], 0.0)
    dyn_head = _mm(dyn_h2, w_mid_ref[M_DYNH]) + b_misc[:, 2 * H:3 * H]
    mu_next = dyn_head[:, 0:L]
    logvar_next = dyn_head[:, L:2 * L]
    std_next = jnp.exp(0.5 * logvar_next)
    # NOTE: z_next = prior_dist_next.rsample() never reaches a returned value.

    # --- single unmasked lane-dense (B,128) store (padding kept zero) ---
    out_ref[...] = jnp.concatenate(
        [state_next_logits, decoder_logits, mu, std, mu_next, std_next, rewcon,
         jnp.zeros((B, OUT_COLS - (O_REW + 2)), f32)], axis=1)


# -----------------------------------------------------------------------------
# parameter construction (PyTorch-style init) and host-side packing
# -----------------------------------------------------------------------------

def _init_linear(key, fan_in, fan_out):
    kw, kb = jax.random.split(key)
    bound = 1.0 / float(fan_in) ** 0.5
    w = jax.random.uniform(kw, (fan_in, fan_out), jnp.float32, -bound, bound)
    b = jax.random.uniform(kb, (fan_out,), jnp.float32, -bound, bound)
    return w, b


def make_raw_params(key):
    S, A, H, L = STATE_DIM, ACTION_DIM, HIDDEN_DIM, LATENT_DIM
    k = jax.random.split(key, 17)
    p = {}
    p["enc_w1"], p["enc_b1"] = _init_linear(k[0], S, H)
    p["enc_w2"], p["enc_b2"] = _init_linear(k[1], H, H)
    p["enc_wmu"], p["enc_bmu"] = _init_linear(k[2], H, L)
    p["enc_wlv"], p["enc_blv"] = _init_linear(k[3], H, L)
    p["dyn_w1"], p["dyn_b1"] = _init_linear(k[4], S, H)
    p["dyn_w2"], p["dyn_b2"] = _init_linear(k[5], H, H)
    p["dyn_wmu"], p["dyn_bmu"] = _init_linear(k[6], H, L)
    p["dyn_wlv"], p["dyn_blv"] = _init_linear(k[7], H, L)
    p["dec_w1"], p["dec_b1"] = _init_linear(k[8], L, H)
    p["dec_w2"], p["dec_b2"] = _init_linear(k[9], H, H)
    p["dec_w3"], p["dec_b3"] = _init_linear(k[10], H, S)
    p["seq_w1"], p["seq_b1"] = _init_linear(k[11], S + L + A, H)
    p["seq_w2"], p["seq_b2"] = _init_linear(k[12], H, S)
    p["rew_w1"], p["rew_b1"] = _init_linear(k[13], S + L, H)
    p["rew_w2"], p["rew_b2"] = _init_linear(k[14], H, 1)
    p["con_w1"], p["con_b1"] = _init_linear(k[15], S + L, H)
    p["con_w2"], p["con_b2"] = _init_linear(k[16], H, 1)
    return p


def pack_params(p):
    """Pack the 34 per-layer tensors into two constant slabs."""
    S, A, H, L = STATE_DIM, ACTION_DIM, HIDDEN_DIM, LATENT_DIM
    f32 = jnp.float32

    w_main = jnp.zeros((W_MAIN_ROWS, FUSED_COLS), f32)
    # state rows: [enc L1 | seq L1 (state) | rew L1 (state) | con L1 (state)]
    w_main = w_main.at[R_WS:R_WS + S, 0:H].set(p["enc_w1"])
    w_main = w_main.at[R_WS:R_WS + S, H:2 * H].set(p["seq_w1"][0:S, :])
    w_main = w_main.at[R_WS:R_WS + S, 2 * H:3 * H].set(p["rew_w1"][0:S, :])
    w_main = w_main.at[R_WS:R_WS + S, 3 * H:4 * H].set(p["con_w1"][0:S, :])
    # z rows: [dec L1 | seq L1 (z) | rew L1 (z) | con L1 (z)]
    w_main = w_main.at[R_WZ:R_WZ + L, 0:H].set(p["dec_w1"])
    w_main = w_main.at[R_WZ:R_WZ + L, H:2 * H].set(p["seq_w1"][S:S + L, :])
    w_main = w_main.at[R_WZ:R_WZ + L, 2 * H:3 * H].set(p["rew_w1"][S:S + L, :])
    w_main = w_main.at[R_WZ:R_WZ + L, 3 * H:4 * H].set(p["con_w1"][S:S + L, :])
    # action rows: only the sequence block
    w_main = w_main.at[R_WA:R_WA + A, H:2 * H].set(p["seq_w1"][S + L:S + L + A, :])
    # output head, dec_h2 part -> decoder logits (cols 0:16)
    w_main = w_main.at[R_WHD:R_WHD + H, 0:S].set(p["dec_w3"])
    # output head, src_h part -> [next logits 16:32 | reward 32 | continue 33]
    w_main = w_main.at[R_WHS:R_WHS + H, S:2 * S].set(p["seq_w2"])
    w_main = w_main.at[R_WHS + H:R_WHS + 2 * H, 2 * S].set(p["rew_w2"][:, 0])
    w_main = w_main.at[R_WHS + 2 * H:R_WHS + 3 * H, 2 * S + 1].set(p["con_w2"][:, 0])
    # bias rows
    w_main = w_main.at[R_BIAS + B_SA, :].set(
        jnp.concatenate([p["enc_b1"], p["seq_b1"], p["rew_b1"], p["con_b1"]]))
    w_main = w_main.at[R_BIAS + B_MID, :].set(
        jnp.concatenate([p["enc_b2"], p["dec_b2"], p["dyn_b1"], p["dyn_b2"]]))
    w_main = w_main.at[R_BIAS + B_MISC, :].set(jnp.concatenate([
        p["dec_b1"],
        p["enc_bmu"], p["enc_blv"], jnp.zeros((H - 2 * L,), f32),
        p["dyn_bmu"], p["dyn_blv"], jnp.zeros((H - 2 * L,), f32),
        jnp.zeros((H,), f32)]))
    w_main = w_main.at[R_BIAS + B_HEAD, :].set(jnp.concatenate([
        p["dec_b3"], p["seq_b2"], p["rew_b2"], p["con_b2"],
        jnp.zeros((FUSED_COLS - 2 * S - 2,), f32)]))

    # middle 32x32 blocks, leading-axis indexed (heads zero-padded to 32 cols)
    w_mid = jnp.zeros((6, H, H), f32)
    w_mid = w_mid.at[M_ENC2].set(p["enc_w2"])
    w_mid = w_mid.at[M_DEC2].set(p["dec_w2"])
    w_mid = w_mid.at[M_DYN1, 0:S, :].set(p["dyn_w1"])
    w_mid = w_mid.at[M_DYN2].set(p["dyn_w2"])
    w_mid = w_mid.at[M_ENCH, :, 0:2 * L].set(
        jnp.concatenate([p["enc_wmu"], p["enc_wlv"]], axis=1))
    w_mid = w_mid.at[M_DYNH, :, 0:2 * L].set(
        jnp.concatenate([p["dyn_wmu"], p["dyn_wlv"]], axis=1))
    return w_main, w_mid


# -----------------------------------------------------------------------------
# forward wrapper
# -----------------------------------------------------------------------------

def simulator_v3_forward(state, action, eps, w_main, w_mid):
    B = state.shape[0]
    S, L = STATE_DIM, LATENT_DIM
    vmem = pl.BlockSpec(memory_space=pltpu.MemorySpace.VMEM)
    out = pl.pallas_call(
        simulator_kernel,
        out_shape=jax.ShapeDtypeStruct((B, OUT_COLS), jnp.float32),
        in_specs=[vmem] * 5,
        out_specs=vmem,
    )(state, action, eps, w_main, w_mid)

    state_next_logits = out[:, O_NEXT:O_NEXT + S]
    decoder_logits = out[:, O_DEC:O_DEC + S]
    mu = out[:, O_MU:O_MU + L]
    std = out[:, O_STD:O_STD + L]
    mu_next = out[:, O_MUN:O_MUN + L]
    std_next = out[:, O_STDN:O_STDN + L]
    reward_logits = out[:, O_REW:O_REW + 1]
    continue_logits = out[:, O_CON:O_CON + 1]
    return (state_next_logits, reward_logits, continue_logits, decoder_logits,
            mu_next, std_next, mu, std)


# -----------------------------------------------------------------------------
# pure-JAX reference (mirrors the PyTorch module); mm_dtype selects the MXU
# operand precision so a numerics-matched (bf16) check and a full-f32 module
# check can both be made.
# -----------------------------------------------------------------------------

def reference_forward(state, action, eps, p, mm_dtype=jnp.float32):
    def lin(x, w, b):
        return jnp.dot(x.astype(mm_dtype), w.astype(mm_dtype),
                       preferred_element_type=jnp.float32) + b

    h = jax.nn.relu(lin(state, p["enc_w1"], p["enc_b1"]))
    h = jax.nn.relu(lin(h, p["enc_w2"], p["enc_b2"]))
    mu = lin(h, p["enc_wmu"], p["enc_bmu"])
    logvar = lin(h, p["enc_wlv"], p["enc_blv"])
    std = jnp.exp(0.5 * logvar)
    z = mu + std * eps

    d = jax.nn.relu(lin(z, p["dec_w1"], p["dec_b1"]))
    d = jax.nn.relu(lin(d, p["dec_w2"], p["dec_b2"]))
    dec_logits = lin(d, p["dec_w3"], p["dec_b3"])

    sx = jnp.concatenate([state, z, action], axis=1)
    sh = jax.nn.relu(lin(sx, p["seq_w1"], p["seq_b1"]))
    nxt = lin(sh, p["seq_w2"], p["seq_b2"])
    probs = jax.nn.softmax(nxt, axis=-1)
    one_hot = jax.nn.one_hot(jnp.argmax(probs, axis=-1), STATE_DIM, dtype=jnp.float32)
    sample = one_hot + probs - lax.stop_gradient(probs)

    dh = jax.nn.relu(lin(sample, p["dyn_w1"], p["dyn_b1"]))
    dh = jax.nn.relu(lin(dh, p["dyn_w2"], p["dyn_b2"]))
    mu_n = lin(dh, p["dyn_wmu"], p["dyn_bmu"])
    logvar_n = lin(dh, p["dyn_wlv"], p["dyn_blv"])
    std_n = jnp.exp(0.5 * logvar_n)

    rx = jnp.concatenate([state, z], axis=1)
    rh = jax.nn.relu(lin(rx, p["rew_w1"], p["rew_b1"]))
    rew = lin(rh, p["rew_w2"], p["rew_b2"])
    ch = jax.nn.relu(lin(rx, p["con_w1"], p["con_b1"]))
    con = lin(ch, p["con_w2"], p["con_b2"])
    return nxt, rew, con, dec_logits, mu_n, std_n, mu, std


if __name__ == "__main__":
    key = jax.random.PRNGKey(0)
    k_state, k_action, k_eps, k_params = jax.random.split(key, 4)

    state = jax.random.normal(k_state, (BATCH, STATE_DIM), jnp.float32)
    act_idx = jax.random.randint(k_action, (BATCH,), 0, ACTION_DIM)
    action = jax.nn.one_hot(act_idx, ACTION_DIM, dtype=jnp.float32)
    eps = jax.random.normal(k_eps, (BATCH, LATENT_DIM), jnp.float32)

    raw = make_raw_params(k_params)
    w_main, w_mid = pack_params(raw)

    fwd = jax.jit(simulator_v3_forward)
    outs = jax.block_until_ready(fwd(state, action, eps, w_main, w_mid))

    names = ["state_next_logits", "reward_logits", "continue_logits",
             "decoder_logits", "mu_next", "std_next", "mu", "std"]

    # 1) numerics-matched check: reference uses the same bf16 MXU operands /
    #    f32 accumulation as the kernel (catches packing / wiring bugs).
    refs_bf16 = reference_forward(state, action, eps, raw, mm_dtype=jnp.bfloat16)
    argmax_agree = bool(jnp.all(jnp.argmax(outs[0], axis=-1)
                                == jnp.argmax(refs_bf16[0], axis=-1)))
    for name, got, want in zip(names, outs, refs_bf16):
        assert got.shape == want.shape, (name, got.shape, want.shape)
        assert bool(jnp.all(jnp.isfinite(got))), name
        if name in ("mu_next", "std_next") and not argmax_agree:
            # near-tied logits make the argmax (and everything downstream)
            # ill-conditioned; skip the chaotic outputs in that rare case.
            continue
        err = float(jnp.max(jnp.abs(got - want)))
        assert bool(jnp.allclose(got, want, atol=1e-2, rtol=1e-2)), (name, err)

    # 2) fidelity vs the full-f32 module (loose tolerance for the bf16 MXU
    #    operands); argmax-downstream outputs are skipped for the same reason.
    refs_f32 = reference_forward(state, action, eps, raw, mm_dtype=jnp.float32)
    for name, got, want in zip(names, outs, refs_f32):
        if name in ("mu_next", "std_next"):
            continue
        err = float(jnp.max(jnp.abs(got - want)))
        assert bool(jnp.allclose(got, want, atol=5e-2, rtol=5e-2)), (name, err)

    print("KERNEL_OK")
</pallas_src>

<mosaic_0001>
module attributes {stable_mosaic.version = 11 : i64} {
  func.func @simulator_kernel(%arg0: memref<8x16xf32, #tpu.memory_space<vmem>>, %arg1: memref<8x4xf32, #tpu.memory_space<vmem>>, %arg2: memref<8x8xf32, #tpu.memory_space<vmem>>, %arg3: memref<168x128xf32, #tpu.memory_space<vmem>>, %arg4: memref<6x32x32xf32, #tpu.memory_space<vmem>>, %arg5: memref<8x128xf32, #tpu.memory_space<vmem>>) attributes {dimension_semantics = [], scalar_prefetch = 0 : i64, scratch_operands = 0 : i64, tpu.core_type = #tpu.core_type<tc>} {
    %c160 = arith.constant 160 : index
    %c0 = arith.constant 0 : index
    %0 = vector.load %arg3[%c160, %c0] : memref<168x128xf32, #tpu.memory_space<vmem>>, vector<4x128xf32>
    %1 = vector.extract_strided_slice %0 {offsets = [0, 0], sizes = [1, 128], strides = [1, 1]} : vector<4x128xf32> to vector<1x128xf32>
    %2 = vector.extract_strided_slice %0 {offsets = [1, 0], sizes = [1, 128], strides = [1, 1]} : vector<4x128xf32> to vector<1x128xf32>
    %3 = vector.extract_strided_slice %0 {offsets = [2, 0], sizes = [1, 128], strides = [1, 1]} : vector<4x128xf32> to vector<1x128xf32>
    %4 = vector.extract_strided_slice %0 {offsets = [3, 0], sizes = [1, 128], strides = [1, 1]} : vector<4x128xf32> to vector<1x128xf32>
    %c0_0 = arith.constant 0 : index
    %c0_1 = arith.constant 0 : index
    %5 = vector.load %arg0[%c0_0, %c0_1] : memref<8x16xf32, #tpu.memory_space<vmem>>, vector<8x16xf32>
    %c0_2 = arith.constant 0 : index
    %c0_3 = arith.constant 0 : index
    %6 = vector.load %arg3[%c0_2, %c0_3] : memref<168x128xf32, #tpu.memory_space<vmem>>, vector<16x128xf32>
    %7 = arith.truncf %5 : vector<8x16xf32> to vector<8x16xbf16>
    %8 = arith.truncf %6 : vector<16x128xf32> to vector<16x128xbf16>
    %cst = arith.constant dense<0.000000e+00> : vector<8x128xf32>
    %9 = tpu.matmul %7, %8, %cst {dimension_numbers = #tpu.dot_dimension_numbers<[1], [0], [0], [1], [0, 0, 1, 1], [], []>} : vector<8x16xbf16>, vector<16x128xbf16>, vector<8x128xf32> -> vector<8x128xf32>
    %c0_4 = arith.constant 0 : index
    %c0_5 = arith.constant 0 : index
    %10 = vector.load %arg1[%c0_4, %c0_5] : memref<8x4xf32, #tpu.memory_space<vmem>>, vector<8x4xf32>
    %c24 = arith.constant 24 : index
    %c0_6 = arith.constant 0 : index
    %11 = vector.load %arg3[%c24, %c0_6] : memref<168x128xf32, #tpu.memory_space<vmem>>, vector<4x128xf32>
    %12 = arith.truncf %10 : vector<8x4xf32> to vector<8x4xbf16>
    %13 = arith.truncf %11 : vector<4x128xf32> to vector<4x128xbf16>
    %cst_7 = arith.constant dense<0.000000e+00> : vector<8x128xf32>
    %14 = tpu.matmul %12, %13, %cst_7 {dimension_numbers = #tpu.dot_dimension_numbers<[1], [0], [0], [1], [0, 0, 1, 1], [], []>} : vector<8x4xbf16>, vector<4x128xbf16>, vector<8x128xf32> -> vector<8x128xf32>
    %15 = arith.addf %9, %14 : vector<8x128xf32>
    %16 = vector.broadcast %1 : vector<1x128xf32> to vector<8x128xf32>
    %17 = arith.addf %15, %16 : vector<8x128xf32>
    %18 = vector.extract_strided_slice %17 {offsets = [0, 0], sizes = [8, 32], strides = [1, 1]} : vector<8x128xf32> to vector<8x32xf32>
    %cst_8 = arith.constant 0.000000e+00 : f32
    %19 = vector.broadcast %cst_8 : f32 to vector<8x32xf32>
    %20 = arith.maximumf %18, %19 : vector<8x32xf32>
    %c0_9 = arith.constant 0 : index
    %c0_10 = arith.constant 0 : index
    %c0_11 = arith.constant 0 : index
    %21 = vector.load %arg4[%c0_9, %c0_10, %c0_11] : memref<6x32x32xf32, #tpu.memory_space<vmem>>, vector<1x32x32xf32>
    %22 = vector.shape_cast %21 : vector<1x32x32xf32> to vector<32x32xf32>
    %23 = arith.truncf %20 : vector<8x32xf32> to vector<8x32xbf16>
    %24 = arith.truncf %22 : vector<32x32xf32> to vector<32x32xbf16>
    %cst_12 = arith.constant dense<0.000000e+00> : vector<8x32xf32>
    %25 = tpu.matmul %23, %24, %cst_12 {dimension_numbers = #tpu.dot_dimension_numbers<[1], [0], [0], [1], [0, 0, 1, 1], [], []>} : vector<8x32xbf16>, vector<32x32xbf16>, vector<8x32xf32> -> vector<8x32xf32>
    %26 = vector.extract_strided_slice %2 {offsets = [0, 0], sizes = [1, 32], strides = [1, 1]} : vector<1x128xf32> to vector<1x32xf32>
    %27 = vector.broadcast %26 : vector<1x32xf32> to vector<8x32xf32>
    %28 = arith.addf %25, %27 : vector<8x32xf32>
    %cst_13 = arith.constant 0.000000e+00 : f32
    %29 = vector.broadcast %cst_13 : f32 to vector<8x32xf32>
    %30 = arith.maximumf %28, %29 : vector<8x32xf32>
    %c4 = arith.constant 4 : index
    %c0_14 = arith.constant 0 : index
    %c0_15 = arith.constant 0 : index
    %31 = vector.load %arg4[%c4, %c0_14, %c0_15] : memref<6x32x32xf32, #tpu.memory_space<vmem>>, vector<1x32x32xf32>
    %32 = vector.shape_cast %31 : vector<1x32x32xf32> to vector<32x32xf32>
    %33 = arith.truncf %30 : vector<8x32xf32> to vector<8x32xbf16>
    %34 = arith.truncf %32 : vector<32x32xf32> to vector<32x32xbf16>
    %cst_16 = arith.constant dense<0.000000e+00> : vector<8x32xf32>
    %35 = tpu.matmul %33, %34, %cst_16 {dimension_numbers = #tpu.dot_dimension_numbers<[1], [0], [0], [1], [0, 0, 1, 1], [], []>} : vector<8x32xbf16>, vector<32x32xbf16>, vector<8x32xf32> -> vector<8x32xf32>
    %36 = vector.extract_strided_slice %3 {offsets = [0, 32], sizes = [1, 32], strides = [1, 1]} : vector<1x128xf32> to vector<1x32xf32>
    %37 = vector.broadcast %36 : vector<1x32xf32> to vector<8x32xf32>
    %38 = arith.addf %35, %37 : vector<8x32xf32>
    %39 = vector.extract_strided_slice %38 {offsets = [0, 0], sizes = [8, 8], strides = [1, 1]} : vector<8x32xf32> to vector<8x8xf32>
    %40 = vector.extract_strided_slice %38 {offsets = [0, 8], sizes = [8, 8], strides = [1, 1]} : vector<8x32xf32> to vector<8x8xf32>
    %cst_17 = arith.constant 5.000000e-01 : f32
    %41 = vector.broadcast %cst_17 : f32 to vector<8x8xf32>
    %42 = arith.mulf %41, %40 : vector<8x8xf32>
    %43 = math.exp %42 : vector<8x8xf32>
    %c0_18 = arith.constant 0 : index
    %c0_19 = arith.constant 0 : index
    %44 = vector.load %arg2[%c0_18, %c0_19] : memref<8x8xf32, #tpu.memory_space<vmem>>, vector<8x8xf32>
    %45 = arith.mulf %43, %44 : vector<8x8xf32>
    %46 = arith.addf %39, %45 : vector<8x8xf32>
    %c16 = arith.constant 16 : index
    %c0_20 = arith.constant 0 : index
    %47 = vector.load %arg3[%c16, %c0_20] : memref<168x128xf32, #tpu.memory_space<vmem>>, vector<8x128xf32>
    %48 = arith.truncf %46 : vector<8x8xf32> to vector<8x8xbf16>
    %49 = arith.truncf %47 : vector<8x128xf32> to vector<8x128xbf16>
    %cst_21 = arith.constant dense<0.000000e+00> : vector<8x128xf32>
    %50 = tpu.matmul %48, %49, %cst_21 {dimension_numbers = #tpu.dot_dimension_numbers<[1], [0], [0], [1], [0, 0, 1, 1], [], []>} : vector<8x8xbf16>, vector<8x128xbf16>, vector<8x128xf32> -> vector<8x128xf32>
    %51 = vector.extract_strided_slice %50 {offsets = [0, 0], sizes = [8, 32], strides = [1, 1]} : vector<8x128xf32> to vector<8x32xf32>
    %52 = vector.extract_strided_slice %3 {offsets = [0, 0], sizes = [1, 32], strides = [1, 1]} : vector<1x128xf32> to vector<1x32xf32>
    %53 = vector.broadcast %52 : vector<1x32xf32> to vector<8x32xf32>
    %54 = arith.addf %51, %53 : vector<8x32xf32>
    %cst_22 = arith.constant 0.000000e+00 : f32
    %55 = vector.broadcast %cst_22 : f32 to vector<8x32xf32>
    %56 = arith.maximumf %54, %55 : vector<8x32xf32>
    %57 = vector.extract_strided_slice %17 {offsets = [0, 32], sizes = [8, 96], strides = [1, 1]} : vector<8x128xf32> to vector<8x96xf32>
    %58 = vector.extract_strided_slice %50 {offsets = [0, 32], sizes = [8, 96], strides = [1, 1]} : vector<8x128xf32> to vector<8x96xf32>
    %59 = arith.addf %57, %58 : vector<8x96xf32>
    %cst_23 = arith.constant 0.000000e+00 : f32
    %60 = vector.broadcast %cst_23 : f32 to vector<8x96xf32>
    %61 = arith.maximumf %59, %60 : vector<8x96xf32>
    %c1 = arith.constant 1 : index
    %c0_24 = arith.constant 0 : index
    %c0_25 = arith.constant 0 : index
    %62 = vector.load %arg4[%c1, %c0_24, %c0_25] : memref<6x32x32xf32, #tpu.memory_space<vmem>>, vector<1x32x32xf32>
    %63 = vector.shape_cast %62 : vector<1x32x32xf32> to vector<32x32xf32>
    %64 = arith.truncf %56 : vector<8x32xf32> to vector<8x32xbf16>
    %65 = arith.truncf %63 : vector<32x32xf32> to vector<32x32xbf16>
    %cst_26 = arith.constant dense<0.000000e+00> : vector<8x32xf32>
    %66 = tpu.matmul %64, %65, %cst_26 {dimension_numbers = #tpu.dot_dimension_numbers<[1], [0], [0], [1], [0, 0, 1, 1], [], []>} : vector<8x32xbf16>, vector<32x32xbf16>, vector<8x32xf32> -> vector<8x32xf32>
    %67 = vector.extract_strided_slice %2 {offsets = [0, 32], sizes = [1, 32], strides = [1, 1]} : vector<1x128xf32> to vector<1x32xf32>
    %68 = vector.broadcast %67 : vector<1x32xf32> to vector<8x32xf32>
    %69 = arith.addf %66, %68 : vector<8x32xf32>
    %cst_27 = arith.constant 0.000000e+00 : f32
    %70 = vector.broadcast %cst_27 : f32 to vector<8x32xf32>
    %71 = arith.maximumf %69, %70 : vector<8x32xf32>
    %c32 = arith.constant 32 : index
    %c0_28 = arith.constant 0 : index
    %72 = vector.load %arg3[%c32, %c0_28] : memref<168x128xf32, #tpu.memory_space<vmem>>, vector<32x128xf32>
    %73 = arith.truncf %71 : vector<8x32xf32> to vector<8x32xbf16>
    %74 = arith.truncf %72 : vector<32x128xf32> to vector<32x128xbf16>
    %cst_29 = arith.constant dense<0.000000e+00> : vector<8x128xf32>
    %75 = tpu.matmul %73, %74, %cst_29 {dimension_numbers = #tpu.dot_dimension_numbers<[1], [0], [0], [1], [0, 0, 1, 1], [], []>} : vector<8x32xbf16>, vector<32x128xbf16>, vector<8x128xf32> -> vector<8x128xf32>
    %c64 = arith.constant 64 : index
    %c0_30 = arith.constant 0 : index
    %76 = vector.load %arg3[%c64, %c0_30] : memref<168x128xf32, #tpu.memory_space<vmem>>, vector<96x128xf32>
    %77 = arith.truncf %61 : vector<8x96xf32> to vector<8x96xbf16>
    %78 = arith.truncf %76 : vector<96x128xf32> to vector<96x128xbf16>
    %cst_31 = arith.constant dense<0.000000e+00> : vector<8x128xf32>
    %79 = tpu.matmul %77, %78, %cst_31 {dimension_numbers = #tpu.dot_dimension_numbers<[1], [0], [0], [1], [0, 0, 1, 1], [], []>} : vector<8x96xbf16>, vector<96x128xbf16>, vector<8x128xf32> -> vector<8x128xf32>
    %80 = arith.addf %75, %79 : vector<8x128xf32>
    %81 = vector.broadcast %4 : vector<1x128xf32> to vector<8x128xf32>
    %82 = arith.addf %80, %81 : vector<8x128xf32>
    %83 = vector.extract_strided_slice %82 {offsets = [0, 0], sizes = [8, 16], strides = [1, 1]} : vector<8x128xf32> to vector<8x16xf32>
    %84 = vector.extract_strided_slice %82 {offsets = [0, 16], sizes = [8, 16], strides = [1, 1]} : vector<8x128xf32> to vector<8x16xf32>
    %85 = vector.extract_strided_slice %82 {offsets = [0, 32], sizes = [8, 2], strides = [1, 1]} : vector<8x128xf32> to vector<8x2xf32>
    %86 = tpu.iota {dimensions = array<i32: 1>} : vector<8x16xi32>
    %cst_32 = arith.constant dense<0xFF800000> : vector<8xf32>
    %87 = vector.multi_reduction <maximumf>, %84, %cst_32 [1] : vector<8x16xf32> to vector<8xf32>
    %88 = vector.shape_cast %87 : vector<8xf32> to vector<8x1xf32>
    %89 = vector.broadcast %88 : vector<8x1xf32> to vector<8x16xf32>
    %90 = arith.cmpf oge, %84, %89 : vector<8x16xf32>
    %c16_i32 = arith.constant 16 : i32
    %91 = vector.broadcast %c16_i32 : i32 to vector<8x16xi32>
    %92 = arith.select %90, %86, %91 : vector<8x16xi1>, vector<8x16xi32>
    %cst_33 = arith.constant dense<2147483647> : vector<8xi32>
    %93 = vector.multi_reduction <minsi>, %92, %cst_33 [1] : vector<8x16xi32> to vector<8xi32>
    %94 = vector.shape_cast %93 : vector<8xi32> to vector<8x1xi32>
    %95 = tpu.iota {dimensions = array<i32: 1>} : vector<8x32xi32>
    %96 = vector.broadcast %94 : vector<8x1xi32> to vector<8x32xi32>
    %97 = arith.cmpi eq, %95, %96 : vector<8x32xi32>
    %98 = arith.extui %97 : vector<8x32xi1> to vector<8x32xi32>
    %99 = arith.sitofp %98 : vector<8x32xi32> to vector<8x32xf32>
    %c2 = arith.constant 2 : index
    %c0_34 = arith.constant 0 : index
    %c0_35 = arith.constant 0 : index
    %100 = vector.load %arg4[%c2, %c0_34, %c0_35] : memref<6x32x32xf32, #tpu.memory_space<vmem>>, vector<1x32x32xf32>
    %101 = vector.shape_cast %100 : vector<1x32x32xf32> to vector<32x32xf32>
    %102 = arith.truncf %99 : vector<8x32xf32> to vector<8x32xbf16>
    %103 = arith.truncf %101 : vector<32x32xf32> to vector<32x32xbf16>
    %cst_36 = arith.constant dense<0.000000e+00> : vector<8x32xf32>
    %104 = tpu.matmul %102, %103, %cst_36 {dimension_numbers = #tpu.dot_dimension_numbers<[1], [0], [0], [1], [0, 0, 1, 1], [], []>} : vector<8x32xbf16>, vector<32x32xbf16>, vector<8x32xf32> -> vector<8x32xf32>
    %105 = vector.extract_strided_slice %2 {offsets = [0, 64], sizes = [1, 32], strides = [1, 1]} : vector<1x128xf32> to vector<1x32xf32>
    %106 = vector.broadcast %105 : vector<1x32xf32> to vector<8x32xf32>
    %107 = arith.addf %104, %106 : vector<8x32xf32>
    %cst_37 = arith.constant 0.000000e+00 : f32
    %108 = vector.broadcast %cst_37 : f32 to vector<8x32xf32>
    %109 = arith.maximumf %107, %108 : vector<8x32xf32>
    %c3 = arith.constant 3 : index
    %c0_38 = arith.constant 0 : index
    %c0_39 = arith.constant 0 : index
    %110 = vector.load %arg4[%c3, %c0_38, %c0_39] : memref<6x32x32xf32, #tpu.memory_space<vmem>>, vector<1x32x32xf32>
    %111 = vector.shape_cast %110 : vector<1x32x32xf32> to vector<32x32xf32>
    %112 = arith.truncf %109 : vector<8x32xf32> to vector<8x32xbf16>
    %113 = arith.truncf %111 : vector<32x32xf32> to vector<32x32xbf16>
    %cst_40 = arith.constant dense<0.000000e+00> : vector<8x32xf32>
    %114 = tpu.matmul %112, %113, %cst_40 {dimension_numbers = #tpu.dot_dimension_numbers<[1], [0], [0], [1], [0, 0, 1, 1], [], []>} : vector<8x32xbf16>, vector<32x32xbf16>, vector<8x32xf32> -> vector<8x32xf32>
    %115 = vector.extract_strided_slice %2 {offsets = [0, 96], sizes = [1, 32], strides = [1, 1]} : vector<1x128xf32> to vector<1x32xf32>
    %116 = vector.broadcast %115 : vector<1x32xf32> to vector<8x32xf32>
    %117 = arith.addf %114, %116 : vector<8x32xf32>
    %cst_41 = arith.constant 0.000000e+00 : f32
    %118 = vector.broadcast %cst_41 : f32 to vector<8x32xf32>
    %119 = arith.maximumf %117, %118 : vector<8x32xf32>
    %c5 = arith.constant 5 : index
    %c0_42 = arith.constant 0 : index
    %c0_43 = arith.constant 0 : index
    %120 = vector.load %arg4[%c5, %c0_42, %c0_43] : memref<6x32x32xf32, #tpu.memory_space<vmem>>, vector<1x32x32xf32>
    %121 = vector.shape_cast %120 : vector<1x32x32xf32> to vector<32x32xf32>
    %122 = arith.truncf %119 : vector<8x32xf32> to vector<8x32xbf16>
    %123 = arith.truncf %121 : vector<32x32xf32> to vector<32x32xbf16>
    %cst_44 = arith.constant dense<0.000000e+00> : vector<8x32xf32>
    %124 = tpu.matmul %122, %123, %cst_44 {dimension_numbers = #tpu.dot_dimension_numbers<[1], [0], [0], [1], [0, 0, 1, 1], [], []>} : vector<8x32xbf16>, vector<32x32xbf16>, vector<8x32xf32> -> vector<8x32xf32>
    %125 = vector.extract_strided_slice %3 {offsets = [0, 64], sizes = [1, 32], strides = [1, 1]} : vector<1x128xf32> to vector<1x32xf32>
    %126 = vector.broadcast %125 : vector<1x32xf32> to vector<8x32xf32>
    %127 = arith.addf %124, %126 : vector<8x32xf32>
    %128 = vector.extract_strided_slice %127 {offsets = [0, 0], sizes = [8, 8], strides = [1, 1]} : vector<8x32xf32> to vector<8x8xf32>
    %129 = vector.extract_strided_slice %127 {offsets = [0, 8], sizes = [8, 8], strides = [1, 1]} : vector<8x32xf32> to vector<8x8xf32>
    %cst_45 = arith.constant 5.000000e-01 : f32
    %130 = vector.broadcast %cst_45 : f32 to vector<8x8xf32>
    %131 = arith.mulf %130, %129 : vector<8x8xf32>
    %132 = math.exp %131 : vector<8x8xf32>
    %cst_46 = arith.constant 0.000000e+00 : f32
    %133 = vector.broadcast %cst_46 : f32 to vector<8x62xf32>
    %134 = tpu.concatenate %84, %83, %39, %43, %128, %132, %85, %133 in 1 : vector<8x16xf32>, vector<8x16xf32>, vector<8x8xf32>, vector<8x8xf32>, vector<8x8xf32>, vector<8x8xf32>, vector<8x2xf32>, vector<8x62xf32> -> vector<8x128xf32>
    %c0_47 = arith.constant 0 : index
    %c0_48 = arith.constant 0 : index
    %135 = vector.load %arg5[%c0_47, %c0_48] : memref<8x128xf32, #tpu.memory_space<vmem>>, vector<8x128xf32>
    tpu.vector_store %arg5[%c0_47, %c0_48], %134 {strides = array<i32>} : memref<8x128xf32, #tpu.memory_space<vmem>>, vector<8x128xf32>,
    return
  }
}

</mosaic_0001>

<llo_original>
// kernel: simulator_v3_forward.1
$region0: #{simulator_v3_forward.1}
  #allocation0 [shape = 'u32[]', space=smem, size = 0x4, offset = 0x4, fixed_abs, tag = 'smem constant byte address 0x4 - core index']
  #allocation1 [shape = 'u32[144,128]{1,0:T(1,128)}', space=vmem, size = 0x12000, scoped, tag = 'internal scratch']
  %s0 = inlined_call_operand.vmem [shape: f32[8,16], index: 0, kind: input, shape index: {}]
  %s1 = inlined_call_operand.vmem [shape: f32[8,4], index: 1, kind: input, shape index: {}]
  %s2 = inlined_call_operand.vmem [shape: f32[8,8], index: 2, kind: input, shape index: {}]
  %s3 = inlined_call_operand.hbm [shape: f32[168,128], index: 3, kind: input, shape index: {}]
  %s4 = inlined_call_operand.hbm [shape: f32[6,32,32], index: 4, kind: input, shape index: {}]
  %s5 = inlined_call_operand.vmem [shape: f32[8,128], index: 5, kind: output, shape index: {}]
  %s6 = sld [smem:[#allocation0]]
  $region38: #{simulator_v3_forward.1} parent=0
    _
  %s8 = ssub.s32 1, %s6
  %s9 = scalar_select 0, %s8, %s6
  $region1: #{simulator_v3_forward.1} parent=0
    #allocation2 [shape = 'u8[86016]{0}', space=vmem, size = 0x15000, scoped, tag = 'input window, operand 3, single buffered']
    #allocation3 [shape = 's32[1]{0}', space=sflag, size = 0x4, scoped, tag = 'scoped memory for simulator_v3_forward.1']
    #allocation4 [shape = 'u8[98304]{0}', space=vmem, size = 0x18000, scoped, tag = 'input window, operand 4, single buffered']
    #allocation5 [shape = 's32[1]{0}', space=sflag, size = 0x4, scoped, tag = 'scoped memory for simulator_v3_forward.1']
    %10 = vsyncpa [#allocation3], 0
    %11 = vsyncpa [#allocation5], 0
    // Predicated region
    $region2: #{simulator_v3_forward.1} parent=1 // pred_check
      _
    $region3: #{simulator_v3_forward.1} parent=1 // pred_check_branch
      %13 = sbr.rel (0) target = $region5
    $region4: #{simulator_v3_forward.1} parent=1 // pred_region
      _
    $region5: #{simulator_v3_forward.1} parent=1 // pred_fallthru
      _
    // Predicated region
    $region6: #{simulator_v3_forward.1} parent=1 // pred_check
      _
    $region7: #{simulator_v3_forward.1} parent=1 // pred_check_branch
      %15 = sbr.rel (0) target = $region9
    $region8: #{simulator_v3_forward.1} parent=1 // pred_region
      _
    $region9: #{simulator_v3_forward.1} parent=1 // pred_fallthru
      _
    // Predicated region
    $region10: #{simulator_v3_forward.1} parent=1 // pred_check
      _
    $region11: #{simulator_v3_forward.1} parent=1 // pred_check_branch
      %17 = sbr.rel (0) target = $region13
    $region12: #{simulator_v3_forward.1} parent=1 // pred_region
      _
    $region13: #{simulator_v3_forward.1} parent=1 // pred_fallthru
      _
    // Predicated region
    $region14: #{simulator_v3_forward.1} parent=1 // pred_check
      _
    $region15: #{simulator_v3_forward.1} parent=1 // pred_check_branch
      %19 = sbr.rel (0) target = $region17
    $region16: #{simulator_v3_forward.1} parent=1 // pred_region
      %s21 = ssub.s32 2688, 2688
      %22 = vsyncadd [#allocation3], %s21
      %s23 = sshll.u32 [#allocation2], 4
      %s24 = int_to_ptr.vmem [resolvable:$true] %s23
      %29 = dma.hbm_to_vmem [thread:$0]  %s3, 2688, %s24, [#allocation3], 128, 128, 8
    $region17: #{simulator_v3_forward.1} parent=1 // pred_fallthru
      _
    // Predicated region
    $region18: #{simulator_v3_forward.1} parent=1 // pred_check
      _
    $region19: #{simulator_v3_forward.1} parent=1 // pred_check_branch
      %31 = sbr.rel (0) target = $region21
    $region20: #{simulator_v3_forward.1} parent=1 // pred_region
      %s33 = ssub.s32 3072, 3072
      %34 = vsyncadd [#allocation5], %s33
      %s35 = sshll.u32 [#allocation4], 4
      %s36 = int_to_ptr.vmem [resolvable:$true] %s35
      %41 = dma.hbm_to_vmem [thread:$0]  %s4, 3072, %s36, [#allocation5], 128, 128, 8
    $region21: #{simulator_v3_forward.1} parent=1 // pred_fallthru
      _
    // Predicated region
    $region22: #{simulator_v3_forward.1} parent=1 // pred_check
      _
    $region23: #{simulator_v3_forward.1} parent=1 // pred_check_branch
      %43 = sbr.rel (0) target = $region25
    $region24: #{simulator_v3_forward.1} parent=1 // pred_region
      %44 = dma.done [#allocation3], 2688
    $region25: #{simulator_v3_forward.1} parent=1 // pred_fallthru
      _
    // Predicated region
    $region26: #{simulator_v3_forward.1} parent=1 // pred_check
      _
    $region27: #{simulator_v3_forward.1} parent=1 // pred_check_branch
      %46 = sbr.rel (0) target = $region29
    $region28: #{simulator_v3_forward.1} parent=1 // pred_region
      %47 = dma.done [#allocation5], 3072
    $region29: #{simulator_v3_forward.1} parent=1 // pred_fallthru
      _
    %v49 = vld [vmem:[#allocation2 + $0xa0] sm:$0xf]
    %v50 = vld [vmem:[%s0] sm:$0xff]
    %v51 = vld [vmem:[#allocation2] sm:$0xff]
    %v52 = vld [vmem:[#allocation2 + $0x8] sm:$0xff]
    %v53 = vpack.c.bf16 %v50, %v50
    %v54 = vpack.c.bf16 %v52, %v51
    %v55 = vld [vmem:[%s1] sm:$0xff]
    %v56 = vld [vmem:[#allocation2 + $0x18] sm:$0xf]
    %v57 = vpack.c.bf16 %v55, %v55
    %v58 = vpack.c.bf16 %v56, %v56
    %vm59 = vcmask 31744
    %v61 = vsel %vm59, %v57, 0
    %vm63 = vcmask 1041408
    %v65 = vsel %vm63, %v58, 0
    %67 = vmatprep.subr.bf16.mxu0 0
    %68 = vmatpush1.bf16.msra.mxu0 %v65
    %69 = vmatprep.subr.bf16.mxu0 0
    %70 = vmatpush1.bf16.msra.mxu0 0
    %71 = vmatprep.subr.bf16.mxu0 0
    %72 = vmatpush1.bf16.msra.mxu0 0
    %73 = vmatprep.subr.bf16.mxu0 0
    %74 = vmatpush1.bf16.msra.mxu0 0
    %75 = vmatprep.subr.bf16.mxu0 0
    %76 = vmatpush1.bf16.msra.mxu0 0
    %77 = vmatprep.subr.bf16.mxu0 0
    %78 = vmatpush1.bf16.msra.mxu0 0
    %79 = vmatprep.subr.bf16.mxu0 0
    %80 = vmatpush1.bf16.msra.mxu0 0
    %81 = vmatprep.subr.bf16.mxu0 0
    %82 = vmatpush1.bf16.msra.mxu0 0
    %83 = vmatprep.subr.bf16.mxu0 0
    %84 = vmatpush1.bf16.msra.mxu0 0
    %85 = vmatprep.subr.bf16.mxu0 0
    %86 = vmatpush1.bf16.msra.mxu0 0
    %87 = vmatprep.subr.bf16.mxu0 0
    %88 = vmatpush1.bf16.msra.mxu0 0
    %89 = vmatprep.subr.bf16.mxu0 0
    %90 = vmatpush1.bf16.msra.mxu0 0
    %91 = vmatprep.subr.bf16.mxu0 0
    %92 = vmatpush1.bf16.msra.mxu0 0
    %93 = vmatprep.subr.bf16.mxu0 0
    %94 = vmatpush1.bf16.msra.mxu0 0
    %95 = vmatprep.subr.bf16.mxu0 0
    %96 = vmatpush1.bf16.msra.mxu0 0
    %97 = vmatprep.subr.bf16.mxu0 0
    %98 = vmatpush1.bf16.msra.mxu0 0
    %99 = vmatprep.mubr.bf16.mxu0 0
    %100 = vmatmul.mubr.bf16.gmra.mrb[0].mxu0 %v61
    %v101 = vpop.f32.mrb[0].mxu0
    %v102 = vadd.f32 0.0, %v101
    %v103 = vpop.f32.mrb[0].mxu0
    %v104 = vpop.f32.mrb[0].mxu0
    %v105 = vpop.f32.mrb[0].mxu0
    %106 = vdwg.mxu0
    %vm107 = vcmask 130048
    %v109 = vsel %vm107, %v53, 0
    %111 = vmatprep.subr.bf16.mxu0 0
    %112 = vmatpush1.bf16.msra.mxu0 %v54
    %113 = vmatprep.subr.bf16.mxu0 0
    %114 = vmatpush1.bf16.msra.mxu0 0
    %115 = vmatprep.subr.bf16.mxu0 0
    %116 = vmatpush1.bf16.msra.mxu0 0
    %117 = vmatprep.subr.bf16.mxu0 0
    %118 = vmatpush1.bf16.msra.mxu0 0
    %119 = vmatprep.subr.bf16.mxu0 0
    %120 = vmatpush1.bf16.msra.mxu0 0
    %121 = vmatprep.subr.bf16.mxu0 0
    %122 = vmatpush1.bf16.msra.mxu0 0
    %123 = vmatprep.subr.bf16.mxu0 0
    %124 = vmatpush1.bf16.msra.mxu0 0
    %125 = vmatprep.subr.bf16.mxu0 0
    %126 = vmatpush1.bf16.msra.mxu0 0
    %127 = vmatprep.subr.bf16.mxu0 0
    %128 = vmatpush1.bf16.msra.mxu0 0
    %129 = vmatprep.subr.bf16.mxu0 0
    %130 = vmatpush1.bf16.msra.mxu0 0
    %131 = vmatprep.subr.bf16.mxu0 0
    %132 = vmatpush1.bf16.msra.mxu0 0
    %133 = vmatprep.subr.bf16.mxu0 0
    %134 = vmatpush1.bf16.msra.mxu0 0
    %135 = vmatprep.subr.bf16.mxu0 0
    %136 = vmatpush1.bf16.msra.mxu0 0
    %137 = vmatprep.subr.bf16.mxu0 0
    %138 = vmatpush1.bf16.msra.mxu0 0
    %139 = vmatprep.subr.bf16.mxu0 0
    %140 = vmatpush1.bf16.msra.mxu0 0
    %141 = vmatprep.subr.bf16.mxu0 0
    %142 = vmatpush1.bf16.msra.mxu0 0
    %143 = vmatprep.mubr.bf16.mxu0 0
    %144 = vmatmul.mubr.bf16.gmra.mrb[0].mxu0 %v109
    %v145 = vpop.f32.mrb[0].mxu0
    %v146 = vadd.f32 %v102, %v145
    %v147 = vpop.f32.mrb[0].mxu0
    %v148 = vpop.f32.mrb[0].mxu0
    %v149 = vpop.f32.mrb[0].mxu0
    %150 = vdwg.mxu0
    %v151 = vlaneseq
    %v152 = vshrl.u32 %v151, 7
    %v153 = vsub.s32 0, %v152
    %v154 = vrot.slane %v49, %v153
    %v155 = vadd.f32 %v146, %v154
    %v156 = vmax.f32 %v155, 0.0
    %v157 = vld [vmem:[#allocation4] sm:$0xff]
    %v158 = vld [vmem:[#allocation4 + $0x8] sm:$0xff]
    %v159 = vld [vmem:[#allocation4 + $0x10] sm:$0xff]
    %v160 = vld [vmem:[#allocation4 + $0x18] sm:$0xff]
    %v161 = vpack.c.bf16 %v156, %v156
    %v162 = vpack.c.bf16 %v158, %v157
    %v163 = vpack.c.bf16 %v160, %v159
    %v164 = vlaneseq
    %v165 = vshrl.u32 %v164, 7
    %v166 = vsub.s32 1, %v165
    %v167 = vrot.slane %v49, %v166
    %vm168 = vcmask 261120
    %v170 = vsel %vm168, %v161, 0
    %172 = vmatprep.subr.bf16.mxu0 0
    %173 = vmatpush1.bf16.msra.mxu0 %v162
    %174 = vmatprep.subr.bf16.mxu0 0
    %175 = vmatpush1.bf16.msra.mxu0 %v163
    %176 = vmatprep.subr.bf16.mxu0 0
    %177 = vmatpush1.bf16.msra.mxu0 0
    %178 = vmatprep.subr.bf16.mxu0 0
    %179 = vmatpush1.bf16.msra.mxu0 0
    %180 = vmatprep.subr.bf16.mxu0 0
    %181 = vmatpush1.bf16.msra.mxu0 0
    %182 = vmatprep.subr.bf16.mxu0 0
    %183 = vmatpush1.bf16.msra.mxu0 0
    %184 = vmatprep.subr.bf16.mxu0 0
    %185 = vmatpush1.bf16.msra.mxu0 0
    %186 = vmatprep.subr.bf16.mxu0 0
    %187 = vmatpush1.bf16.msra.mxu0 0
    %188 = vmatprep.subr.bf16.mxu0 0
    %189 = vmatpush1.bf16.msra.mxu0 0
    %190 = vmatprep.subr.bf16.mxu0 0
    %191 = vmatpush1.bf16.msra.mxu0 0
    %192 = vmatprep.subr.bf16.mxu0 0
    %193 = vmatpush1.bf16.msra.mxu0 0
    %194 = vmatprep.subr.bf16.mxu0 0
    %195 = vmatpush1.bf16.msra.mxu0 0
    %196 = vmatprep.subr.bf16.mxu0 0
    %197 = vmatpush1.bf16.msra.mxu0 0
    %198 = vmatprep.subr.bf16.mxu0 0
    %199 = vmatpush1.bf16.msra.mxu0 0
    %200 = vmatprep.subr.bf16.mxu0 0
    %201 = vmatpush1.bf16.msra.mxu0 0
    %202 = vmatprep.subr.bf16.mxu0 0
    %203 = vmatpush1.bf16.msra.mxu0 0
    %204 = vmatprep.mubr.bf16.mxu0 0
    %205 = vmatmul.mubr.bf16.gmra.mrb[0].mxu0 %v170
    %v206 = vpop.f32.mrb[0].mxu0
    %v207 = vadd.f32 %v167, %v206
    %v208 = vpop.f32.mrb[0].mxu0
    %v209 = vpop.f32.mrb[0].mxu0
    %v210 = vpop.f32.mrb[0].mxu0
    %211 = vdwg.mxu0
    %v212 = vmax.f32 %v207, 0.0
    %s213 = scalar_lea.vmem [#allocation4], 128
    %v214 = vld [vmem:[%s213] sm:$0xff]
    %v215 = vld [vmem:[%s213 + $0x8] sm:$0xff]
    %v216 = vld [vmem:[%s213 + $0x10] sm:$0xff]
    %v217 = vld [vmem:[%s213 + $0x18] sm:$0xff]
    %v218 = vpack.c.bf16 %v212, %v212
    %v219 = vpack.c.bf16 %v215, %v214
    %v220 = vpack.c.bf16 %v217, %v216
    %v221 = vlaneseq
    %v222 = vshrl.u32 %v221, 7
    %v223 = vsub.s32 2, %v222
    %v224 = vrot.slane %v49, %v223
    %226 = vrot.lane.b32.xlu0 %v224, 96
    %v227 = vpop.permute.xlu0 %226
    %v230 = vsel %vm168, %v218, 0
    %232 = vmatprep.subr.bf16.mxu0 0
    %233 = vmatpush1.bf16.msra.mxu0 %v219
    %234 = vmatprep.subr.bf16.mxu0 0
    %235 = vmatpush1.bf16.msra.mxu0 %v220
    %236 = vmatprep.subr.bf16.mxu0 0
    %237 = vmatpush1.bf16.msra.mxu0 0
    %238 = vmatprep.subr.bf16.mxu0 0
    %239 = vmatpush1.bf16.msra.mxu0 0
    %240 = vmatprep.subr.bf16.mxu0 0
    %241 = vmatpush1.bf16.msra.mxu0 0
    %242 = vmatprep.subr.bf16.mxu0 0
    %243 = vmatpush1.bf16.msra.mxu0 0
    %244 = vmatprep.subr.bf16.mxu0 0
    %245 = vmatpush1.bf16.msra.mxu0 0
    %246 = vmatprep.subr.bf16.mxu0 0
    %247 = vmatpush1.bf16.msra.mxu0 0
    %248 = vmatprep.subr.bf16.mxu0 0
    %249 = vmatpush1.bf16.msra.mxu0 0
    %250 = vmatprep.subr.bf16.mxu0 0
    %251 = vmatpush1.bf16.msra.mxu0 0
    %252 = vmatprep.subr.bf16.mxu0 0
    %253 = vmatpush1.bf16.msra.mxu0 0
    %254 = vmatprep.subr.bf16.mxu0 0
    %255 = vmatpush1.bf16.msra.mxu0 0
    %256 = vmatprep.subr.bf16.mxu0 0
    %257 = vmatpush1.bf16.msra.mxu0 0
    %258 = vmatprep.subr.bf16.mxu0 0
    %259 = vmatpush1.bf16.msra.mxu0 0
    %260 = vmatprep.subr.bf16.mxu0 0
    %261 = vmatpush1.bf16.msra.mxu0 0
    %262 = vmatprep.subr.bf16.mxu0 0
    %263 = vmatpush1.bf16.msra.mxu0 0
    %264 = vmatprep.mubr.bf16.mxu0 0
    %265 = vmatmul.mubr.bf16.gmra.mrb[0].mxu0 %v230
    %v266 = vpop.f32.mrb[0].mxu0
    %v267 = vadd.f32 %v227, %v266
    %v268 = vpop.f32.mrb[0].mxu0
    %v269 = vpop.f32.mrb[0].mxu0
    %v270 = vpop.f32.mrb[0].mxu0
    %271 = vdwg.mxu0
    %v272 = vmul.f32 %v267, 0.5
    %v273 = vmul.f32 %v272, 1.442695
    %v274 = vpow.pop %v273
    %v275 = vld [vmem:[%s2] sm:$0xff]
    %277 = vrot.lane.b32.xlu0 %v275, 8
    %v278 = vpop.permute.xlu0 %277
    %v280 = vmul.f32 %v274, %v278
    %282 = vrot.lane.b32.xlu0 %v280, 120
    %v283 = vpop.permute.xlu0 %282
    %v285 = vadd.f32 %v267, %v283
    %v286 = vld [vmem:[#allocation2 + $0x10] sm:$0xff]
    %v287 = vpack.c.bf16 %v285, %v285
    %v288 = vpack.c.bf16 %v286, %v286
    %vm289 = vcmask 64512
    %v291 = vsel %vm289, %v287, 0
    %vm293 = vcmask 1043456
    %v295 = vsel %vm293, %v288, 0
    %297 = vmatprep.subr.bf16.mxu0 0
    %298 = vmatpush1.bf16.msra.mxu0 %v295
    %299 = vmatprep.subr.bf16.mxu0 0
    %300 = vmatpush1.bf16.msra.mxu0 0
    %301 = vmatprep.subr.bf16.mxu0 0
    %302 = vmatpush1.bf16.msra.mxu0 0
    %303 = vmatprep.subr.bf16.mxu0 0
    %304 = vmatpush1.bf16.msra.mxu0 0
    %305 = vmatprep.subr.bf16.mxu0 0
    %306 = vmatpush1.bf16.msra.mxu0 0
    %307 = vmatprep.subr.bf16.mxu0 0
    %308 = vmatpush1.bf16.msra.mxu0 0
    %309 = vmatprep.subr.bf16.mxu0 0
    %310 = vmatpush1.bf16.msra.mxu0 0
    %311 = vmatprep.subr.bf16.mxu0 0
    %312 = vmatpush1.bf16.msra.mxu0 0
    %313 = vmatprep.subr.bf16.mxu0 0
    %314 = vmatpush1.bf16.msra.mxu0 0
    %315 = vmatprep.subr.bf16.mxu0 0
    %316 = vmatpush1.bf16.msra.mxu0 0
    %317 = vmatprep.subr.bf16.mxu0 0
    %318 = vmatpush1.bf16.msra.mxu0 0
    %319 = vmatprep.subr.bf16.mxu0 0
    %320 = vmatpush1.bf16.msra.mxu0 0
    %321 = vmatprep.subr.bf16.mxu0 0
    %322 = vmatpush1.bf16.msra.mxu0 0
    %323 = vmatprep.subr.bf16.mxu0 0
    %324 = vmatpush1.bf16.msra.mxu0 0
    %325 = vmatprep.subr.bf16.mxu0 0
    %326 = vmatpush1.bf16.msra.mxu0 0
    %327 = vmatprep.subr.bf16.mxu0 0
    %328 = vmatpush1.bf16.msra.mxu0 0
    %329 = vmatprep.mubr.bf16.mxu0 0
    %330 = vmatmul.mubr.bf16.gmra.mrb[0].mxu0 %v291
    %v331 = vpop.f32.mrb[0].mxu0
    %v332 = vadd.f32 0.0, %v331
    %v333 = vpop.f32.mrb[0].mxu0
    %v334 = vpop.f32.mrb[0].mxu0
    %v335 = vpop.f32.mrb[0].mxu0
    %336 = vdwg.mxu0
    %v337 = vadd.f32 %v332, %v224
    %v338 = vmax.f32 %v337, 0.0
    %v339 = vadd.f32 %v155, %v332
    %v340 = vmax.f32 %v339, 0.0
    %s341 = scalar_lea.vmem [#allocation4], 32
    %v342 = vld [vmem:[%s341] sm:$0xff]
    %v343 = vld [vmem:[%s341 + $0x8] sm:$0xff]
    %v344 = vld [vmem:[%s341 + $0x10] sm:$0xff]
    %v345 = vld [vmem:[%s341 + $0x18] sm:$0xff]
    %v346 = vpack.c.bf16 %v338, %v338
    %v347 = vpack.c.bf16 %v343, %v342
    %v348 = vpack.c.bf16 %v345, %v344
    %350 = vrot.lane.b32.xlu0 %v167, 96
    %v351 = vpop.permute.xlu0 %350
    %v354 = vsel %vm168, %v346, 0
    %356 = vmatprep.subr.bf16.mxu0 0
    %357 = vmatpush1.bf16.msra.mxu0 %v347
    %358 = vmatprep.subr.bf16.mxu0 0
    %359 = vmatpush1.bf16.msra.mxu0 %v348
    %360 = vmatprep.subr.bf16.mxu0 0
    %361 = vmatpush1.bf16.msra.mxu0 0
    %362 = vmatprep.subr.bf16.mxu0 0
    %363 = vmatpush1.bf16.msra.mxu0 0
    %364 = vmatprep.subr.bf16.mxu0 0
    %365 = vmatpush1.bf16.msra.mxu0 0
    %366 = vmatprep.subr.bf16.mxu0 0
    %367 = vmatpush1.bf16.msra.mxu0 0
    %368 = vmatprep.subr.bf16.mxu0 0
    %369 = vmatpush1.bf16.msra.mxu0 0
    %370 = vmatprep.subr.bf16.mxu0 0
    %371 = vmatpush1.bf16.msra.mxu0 0
    %372 = vmatprep.subr.bf16.mxu0 0
    %373 = vmatpush1.bf16.msra.mxu0 0
    %374 = vmatprep.subr.bf16.mxu0 0
    %375 = vmatpush1.bf16.msra.mxu0 0
    %376 = vmatprep.subr.bf16.mxu0 0
    %377 = vmatpush1.bf16.msra.mxu0 0
    %378 = vmatprep.subr.bf16.mxu0 0
    %379 = vmatpush1.bf16.msra.mxu0 0
    %380 = vmatprep.subr.bf16.mxu0 0
    %381 = vmatpush1.bf16.msra.mxu0 0
    %382 = vmatprep.subr.bf16.mxu0 0
    %383 = vmatpush1.bf16.msra.mxu0 0
    %384 = vmatprep.subr.bf16.mxu0 0
    %385 = vmatpush1.bf16.msra.mxu0 0
    %386 = vmatprep.subr.bf16.mxu0 0
    %387 = vmatpush1.bf16.msra.mxu0 0
    %388 = vmatprep.mubr.bf16.mxu0 0
    %389 = vmatmul.mubr.bf16.gmra.mrb[0].mxu0 %v354
    %v390 = vpop.f32.mrb[0].mxu0
    %v391 = vadd.f32 %v351, %v390
    %v392 = vpop.f32.mrb[0].mxu0
    %v393 = vpop.f32.mrb[0].mxu0
    %v394 = vpop.f32.mrb[0].mxu0
    %395 = vdwg.mxu0
    %v396 = vmax.f32 %v391, 0.0
    %v397 = vld [vmem:[#allocation2 + $0x20] sm:$0xff]
    %v398 = vld [vmem:[#allocation2 + $0x28] sm:$0xff]
    %v399 = vld [vmem:[#allocation2 + $0x30] sm:$0xff]
    %v400 = vld [vmem:[#allocation2 + $0x38] sm:$0xff]
    %v401 = vpack.c.bf16 %v396, %v396
    %v402 = vpack.c.bf16 %v398, %v397
    %v403 = vpack.c.bf16 %v400, %v399
    %v404 = vld [vmem:[#allocation2 + $0x40] sm:$0xff]
    %v405 = vld [vmem:[#allocation2 + $0x48] sm:$0xff]
    %v406 = vld [vmem:[#allocation2 + $0x50] sm:$0xff]
    %v407 = vld [vmem:[#allocation2 + $0x58] sm:$0xff]
    %v408 = vld [vmem:[#allocation2 + $0x60] sm:$0xff]
    %v409 = vld [vmem:[#allocation2 + $0x68] sm:$0xff]
    %v410 = vld [vmem:[#allocation2 + $0x70] sm:$0xff]
    %v411 = vld [vmem:[#allocation2 + $0x78] sm:$0xff]
    %v412 = vld [vmem:[#allocation2 + $0x80] sm:$0xff]
    %v413 = vld [vmem:[#allocation2 + $0x88] sm:$0xff]
    %v414 = vld [vmem:[#allocation2 + $0x90] sm:$0xff]
    %v415 = vld [vmem:[#allocation2 + $0x98] sm:$0xff]
    %v416 = vpack.c.bf16 %v340, %v340
    %v417 = vpack.c.bf16 %v405, %v404
    %v418 = vpack.c.bf16 %v407, %v406
    %v419 = vpack.c.bf16 %v409, %v408
    %v420 = vpack.c.bf16 %v411, %v410
    %v421 = vpack.c.bf16 %v413, %v412
    %v422 = vpack.c.bf16 %v415, %v414
    %424 = vrot.lane.b32.xlu0 %v416, 96
    %v425 = vpop.permute.xlu0 %424
    %vm426 = vcmask 785408
    %v428 = vsel %vm426, %v425, 0
    %430 = vmatprep.subr.bf16.mxu0 0
    %431 = vmatpush1.bf16.msra.mxu0 %v417
    %432 = vmatprep.subr.bf16.mxu0 0
    %433 = vmatpush1.bf16.msra.mxu0 %v418
    %434 = vmatprep.subr.bf16.mxu0 0
    %435 = vmatpush1.bf16.msra.mxu0 %v419
    %436 = vmatprep.subr.bf16.mxu0 0
    %437 = vmatpush1.bf16.msra.mxu0 %v420
    %438 = vmatprep.subr.bf16.mxu0 0
    %439 = vmatpush1.bf16.msra.mxu0 %v421
    %440 = vmatprep.subr.bf16.mxu0 0
    %441 = vmatpush1.bf16.msra.mxu0 %v422
    %442 = vmatprep.subr.bf16.mxu0 0
    %443 = vmatpush1.bf16.msra.mxu0 0
    %444 = vmatprep.subr.bf16.mxu0 0
    %445 = vmatpush1.bf16.msra.mxu0 0
    %446 = vmatprep.subr.bf16.mxu0 0
    %447 = vmatpush1.bf16.msra.mxu0 0
    %448 = vmatprep.subr.bf16.mxu0 0
    %449 = vmatpush1.bf16.msra.mxu0 0
    %450 = vmatprep.subr.bf16.mxu0 0
    %451 = vmatpush1.bf16.msra.mxu0 0
    %452 = vmatprep.subr.bf16.mxu0 0
    %453 = vmatpush1.bf16.msra.mxu0 0
    %454 = vmatprep.subr.bf16.mxu0 0
    %455 = vmatpush1.bf16.msra.mxu0 0
    %456 = vmatprep.subr.bf16.mxu0 0
    %457 = vmatpush1.bf16.msra.mxu0 0
    %458 = vmatprep.subr.bf16.mxu0 0
    %459 = vmatpush1.bf16.msra.mxu0 0
    %460 = vmatprep.subr.bf16.mxu0 0
    %461 = vmatpush1.bf16.msra.mxu0 0
    %462 = vmatprep.mubr.bf16.mxu0 0
    %463 = vmatmul.mubr.bf16.gmra.mrb[0].mxu0 %v428
    %v464 = vpop.f32.mrb[0].mxu0
    %v465 = vadd.f32 0.0, %v464
    %v466 = vpop.f32.mrb[0].mxu0
    %v467 = vpop.f32.mrb[0].mxu0
    %v468 = vpop.f32.mrb[0].mxu0
    %469 = vdwg.mxu0
    %v471 = vsel %vm168, %v401, 0
    %473 = vmatprep.subr.bf16.mxu0 0
    %474 = vmatpush1.bf16.msra.mxu0 %v402
    %475 = vmatprep.subr.bf16.mxu0 0
    %476 = vmatpush1.bf16.msra.mxu0 %v403
    %477 = vmatprep.subr.bf16.mxu0 0
    %478 = vmatpush1.bf16.msra.mxu0 0
    %479 = vmatprep.subr.bf16.mxu0 0
    %480 = vmatpush1.bf16.msra.mxu0 0
    %481 = vmatprep.subr.bf16.mxu0 0
    %482 = vmatpush1.bf16.msra.mxu0 0
    %483 = vmatprep.subr.bf16.mxu0 0
    %484 = vmatpush1.bf16.msra.mxu0 0
    %485 = vmatprep.subr.bf16.mxu0 0
    %486 = vmatpush1.bf16.msra.mxu0 0
    %487 = vmatprep.subr.bf16.mxu0 0
    %488 = vmatpush1.bf16.msra.mxu0 0
    %489 = vmatprep.subr.bf16.mxu0 0
    %490 = vmatpush1.bf16.msra.mxu0 0
    %491 = vmatprep.subr.bf16.mxu0 0
    %492 = vmatpush1.bf16.msra.mxu0 0
    %493 = vmatprep.subr.bf16.mxu0 0
    %494 = vmatpush1.bf16.msra.mxu0 0
    %495 = vmatprep.subr.bf16.mxu0 0
    %496 = vmatpush1.bf16.msra.mxu0 0
    %497 = vmatprep.subr.bf16.mxu0 0
    %498 = vmatpush1.bf16.msra.mxu0 0
    %499 = vmatprep.subr.bf16.mxu0 0
    %500 = vmatpush1.bf16.msra.mxu0 0
    %501 = vmatprep.subr.bf16.mxu0 0
    %502 = vmatpush1.bf16.msra.mxu0 0
    %503 = vmatprep.subr.bf16.mxu0 0
    %504 = vmatpush1.bf16.msra.mxu0 0
    %505 = vmatprep.mubr.bf16.mxu0 0
    %506 = vmatmul.mubr.bf16.gmra.mrb[0].mxu0 %v471
    %v507 = vpop.f32.mrb[0].mxu0
    %v508 = vadd.f32 %v465, %v507
    %v509 = vpop.f32.mrb[0].mxu0
    %v510 = vpop.f32.mrb[0].mxu0
    %v511 = vpop.f32.mrb[0].mxu0
    %512 = vdwg.mxu0
    %v513 = vlaneseq
    %v514 = vshrl.u32 %v513, 7
    %v515 = vsub.s32 3, %v514
    %v516 = vrot.slane %v49, %v515
    %v517 = vadd.f32 %v508, %v516
    %v518 = vlaneseq
    %v519 = vand.u32 %v518, 127
    %vm520 = vcmask 261248
    %v521 = vsel %vm520, %v517, -inf
    %522 = vmax.xlane.f32.xlu0 %v521
    %v523 = vpop.xlane.xlu0 %522
    %vm524 = vcmp.ge.f32.partialorder %v517, %v523
    %525 = vrot.lane.b32.xlu0 %v519, 16
    %v526 = vpop.permute.xlu0 %525
    %v527 = vsel %vm524, %v526, 16
    %v528 = vsel %vm520, %v527, 2147483647
    %v529 = vand.u32 %v528, 65535
    %v530 = vshra.s32 %v528, 16
    %v531 = vcvt.s32.f32 %v529
    %v532 = vcvt.s32.f32 %v530
    %533 = vmin.xlane.f32.xlu0 %v532
    %v534 = vpop.xlane.xlu0 %533
    %vm535 = vcmp.eq.f32.partialorder %v532, %v534
    %v536 = vsel %vm535, %v531, inf
    %537 = vmin.xlane.f32.xlu0 %v536
    %v538 = vpop.xlane.xlu0 %537
    %v539 = vcvt.f32.s32 %v538
    %v540 = vcvt.f32.s32 %v534
    %v541 = vshll.u32 %v540, 16
    %v542 = vadd.s32 %v541, %v539
    %vm543 = vcmp.eq.s32.totalorder %v519, %v542
    %s544 = scalar_lea.vmem [#allocation4], 64
    %v545 = vld [vmem:[%s544] sm:$0xff]
    %v546 = vld [vmem:[%s544 + $0x8] sm:$0xff]
    %v547 = vld [vmem:[%s544 + $0x10] sm:$0xff]
    %v548 = vld [vmem:[%s544 + $0x18] sm:$0xff]
    %v549 = vsel %vm543, 1, 0
    %v550 = vcvt.s32.f32 %v549
    %v551 = vpack.c.bf16 %v550, %v550
    %v552 = vpack.c.bf16 %v546, %v545
    %v553 = vpack.c.bf16 %v548, %v547
    %554 = vrot.lane.b32.xlu0 %v167, 64
    %v555 = vpop.permute.xlu0 %554
    %v558 = vsel %vm168, %v551, 0
    %560 = vmatprep.subr.bf16.mxu0 0
    %561 = vmatpush1.bf16.msra.mxu0 %v552
    %562 = vmatprep.subr.bf16.mxu0 0
    %563 = vmatpush1.bf16.msra.mxu0 %v553
    %564 = vmatprep.subr.bf16.mxu0 0
    %565 = vmatpush1.bf16.msra.mxu0 0
    %566 = vmatprep.subr.bf16.mxu0 0
    %567 = vmatpush1.bf16.msra.mxu0 0
    %568 = vmatprep.subr.bf16.mxu0 0
    %569 = vmatpush1.bf16.msra.mxu0 0
    %570 = vmatprep.subr.bf16.mxu0 0
    %571 = vmatpush1.bf16.msra.mxu0 0
    %572 = vmatprep.subr.bf16.mxu0 0
    %573 = vmatpush1.bf16.msra.mxu0 0
    %574 = vmatprep.subr.bf16.mxu0 0
    %575 = vmatpush1.bf16.msra.mxu0 0
    %576 = vmatprep.subr.bf16.mxu0 0
    %577 = vmatpush1.bf16.msra.mxu0 0
    %578 = vmatprep.subr.bf16.mxu0 0
    %579 = vmatpush1.bf16.msra.mxu0 0
    %580 = vmatprep.subr.bf16.mxu0 0
    %581 = vmatpush1.bf16.msra.mxu0 0
    %582 = vmatprep.subr.bf16.mxu0 0
    %583 = vmatpush1.bf16.msra.mxu0 0
    %584 = vmatprep.subr.bf16.mxu0 0
    %585 = vmatpush1.bf16.msra.mxu0 0
    %586 = vmatprep.subr.bf16.mxu0 0
    %587 = vmatpush1.bf16.msra.mxu0 0
    %588 = vmatprep.subr.bf16.mxu0 0
    %589 = vmatpush1.bf16.msra.mxu0 0
    %590 = vmatprep.subr.bf16.mxu0 0
    %591 = vmatpush1.bf16.msra.mxu0 0
    %592 = vmatprep.mubr.bf16.mxu0 0
    %593 = vmatmul.mubr.bf16.gmra.mrb[0].mxu0 %v558
    %v594 = vpop.f32.mrb[0].mxu0
    %v595 = vadd.f32 %v555, %v594
    %v596 = vpop.f32.mrb[0].mxu0
    %v597 = vpop.f32.mrb[0].mxu0
    %v598 = vpop.f32.mrb[0].mxu0
    %599 = vdwg.mxu0
    %v600 = vmax.f32 %v595, 0.0
    %s601 = scalar_lea.vmem [#allocation4], 96
    %v602 = vld [vmem:[%s601] sm:$0xff]
    %v603 = vld [vmem:[%s601 + $0x8] sm:$0xff]
    %v604 = vld [vmem:[%s601 + $0x10] sm:$0xff]
    %v605 = vld [vmem:[%s601 + $0x18] sm:$0xff]
    %v606 = vpack.c.bf16 %v600, %v600
    %v607 = vpack.c.bf16 %v603, %v602
    %v608 = vpack.c.bf16 %v605, %v604
    %609 = vrot.lane.b32.xlu0 %v167, 32
    %v610 = vpop.permute.xlu0 %609
    %v613 = vsel %vm168, %v606, 0
    %615 = vmatprep.subr.bf16.mxu0 0
    %616 = vmatpush1.bf16.msra.mxu0 %v607
    %617 = vmatprep.subr.bf16.mxu0 0
    %618 = vmatpush1.bf16.msra.mxu0 %v608
    %619 = vmatprep.subr.bf16.mxu0 0
    %620 = vmatpush1.bf16.msra.mxu0 0
    %621 = vmatprep.subr.bf16.mxu0 0
    %622 = vmatpush1.bf16.msra.mxu0 0
    %623 = vmatprep.subr.bf16.mxu0 0
    %624 = vmatpush1.bf16.msra.mxu0 0
    %625 = vmatprep.subr.bf16.mxu0 0
    %626 = vmatpush1.bf16.msra.mxu0 0
    %627 = vmatprep.subr.bf16.mxu0 0
    %628 = vmatpush1.bf16.msra.mxu0 0
    %629 = vmatprep.subr.bf16.mxu0 0
    %630 = vmatpush1.bf16.msra.mxu0 0
    %631 = vmatprep.subr.bf16.mxu0 0
    %632 = vmatpush1.bf16.msra.mxu0 0
    %633 = vmatprep.subr.bf16.mxu0 0
    %634 = vmatpush1.bf16.msra.mxu0 0
    %635 = vmatprep.subr.bf16.mxu0 0
    %636 = vmatpush1.bf16.msra.mxu0 0
    %637 = vmatprep.subr.bf16.mxu0 0
    %638 = vmatpush1.bf16.msra.mxu0 0
    %639 = vmatprep.subr.bf16.mxu0 0
    %640 = vmatpush1.bf16.msra.mxu0 0
    %641 = vmatprep.subr.bf16.mxu0 0
    %642 = vmatpush1.bf16.msra.mxu0 0
    %643 = vmatprep.subr.bf16.mxu0 0
    %644 = vmatpush1.bf16.msra.mxu0 0
    %645 = vmatprep.subr.bf16.mxu0 0
    %646 = vmatpush1.bf16.msra.mxu0 0
    %647 = vmatprep.mubr.bf16.mxu0 0
    %648 = vmatmul.mubr.bf16.gmra.mrb[0].mxu0 %v613
    %v649 = vpop.f32.mrb[0].mxu0
    %v650 = vadd.f32 %v610, %v649
    %v651 = vpop.f32.mrb[0].mxu0
    %v652 = vpop.f32.mrb[0].mxu0
    %v653 = vpop.f32.mrb[0].mxu0
    %654 = vdwg.mxu0
    %v655 = vmax.f32 %v650, 0.0
    %s656 = scalar_lea.vmem [#allocation4], 160
    %v657 = vld [vmem:[%s656] sm:$0xff]
    %v658 = vld [vmem:[%s656 + $0x8] sm:$0xff]
    %v659 = vld [vmem:[%s656 + $0x10] sm:$0xff]
    %v660 = vld [vmem:[%s656 + $0x18] sm:$0xff]
    %v661 = vpack.c.bf16 %v655, %v655
    %v662 = vpack.c.bf16 %v658, %v657
    %v663 = vpack.c.bf16 %v660, %v659
    %664 = vrot.lane.b32.xlu0 %v224, 64
    %v665 = vpop.permute.xlu0 %664
    %v668 = vsel %vm168, %v661, 0
    %670 = vmatprep.subr.bf16.mxu0 0
    %671 = vmatpush1.bf16.msra.mxu0 %v662
    %672 = vmatprep.subr.bf16.mxu0 0
    %673 = vmatpush1.bf16.msra.mxu0 %v663
    %674 = vmatprep.subr.bf16.mxu0 0
    %675 = vmatpush1.bf16.msra.mxu0 0
    %676 = vmatprep.subr.bf16.mxu0 0
    %677 = vmatpush1.bf16.msra.mxu0 0
    %678 = vmatprep.subr.bf16.mxu0 0
    %679 = vmatpush1.bf16.msra.mxu0 0
    %680 = vmatprep.subr.bf16.mxu0 0
    %681 = vmatpush1.bf16.msra.mxu0 0
    %682 = vmatprep.subr.bf16.mxu0 0
    %683 = vmatpush1.bf16.msra.mxu0 0
    %684 = vmatprep.subr.bf16.mxu0 0
    %685 = vmatpush1.bf16.msra.mxu0 0
    %686 = vmatprep.subr.bf16.mxu0 0
    %687 = vmatpush1.bf16.msra.mxu0 0
    %688 = vmatprep.subr.bf16.mxu0 0
    %689 = vmatpush1.bf16.msra.mxu0 0
    %690 = vmatprep.subr.bf16.mxu0 0
    %691 = vmatpush1.bf16.msra.mxu0 0
    %692 = vmatprep.subr.bf16.mxu0 0
    %693 = vmatpush1.bf16.msra.mxu0 0
    %694 = vmatprep.subr.bf16.mxu0 0
    %695 = vmatpush1.bf16.msra.mxu0 0
    %696 = vmatprep.subr.bf16.mxu0 0
    %697 = vmatpush1.bf16.msra.mxu0 0
    %698 = vmatprep.subr.bf16.mxu0 0
    %699 = vmatpush1.bf16.msra.mxu0 0
    %700 = vmatprep.subr.bf16.mxu0 0
    %701 = vmatpush1.bf16.msra.mxu0 0
    %702 = vmatprep.mubr.bf16.mxu0 0
    %703 = vmatmul.mubr.bf16.gmra.mrb[0].mxu0 %v668
    %v704 = vpop.f32.mrb[0].mxu0
    %v705 = vadd.f32 %v665, %v704
    %v706 = vpop.f32.mrb[0].mxu0
    %v707 = vpop.f32.mrb[0].mxu0
    %v708 = vpop.f32.mrb[0].mxu0
    %709 = vdwg.mxu0
    %v710 = vmul.f32 %v705, 0.5
    %v711 = vmul.f32 %v710, 1.442695
    %v712 = vpow.pop %v711
    %714 = vrot.lane.b32.xlu0 %v517, 112
    %v715 = vpop.permute.xlu0 %714
    %717 = vrot.lane.b32.xlu0 %v517, 16
    %v718 = vpop.permute.xlu0 %717
    %721 = vrot.lane.b32.xlu0 %v267, 32
    %v722 = vpop.permute.xlu0 %721
    %725 = vrot.lane.b32.xlu0 %v274, 32
    %v726 = vpop.permute.xlu0 %725
    %729 = vrot.lane.b32.xlu0 %v705, 48
    %v730 = vpop.permute.xlu0 %729
    %733 = vrot.lane.b32.xlu0 %v712, 48
    %v734 = vpop.permute.xlu0 %733
    %736 = vrot.lane.b32.xlu0 %v517, 32
    %v737 = vpop.permute.xlu0 %736
    %v739 = vsel %vm107, %v715, %v718
    %v740 = vsel %vm168, %v739, %v722
    %vm741 = vcmask 326656
    %v742 = vsel %vm741, %v740, %v726
    %vm743 = vcmask 392192
    %v744 = vsel %vm743, %v742, %v730
    %vm745 = vcmask 457728
    %v746 = vsel %vm745, %v744, %v734
    %vm747 = vcmask 523264
    %v748 = vsel %vm747, %v746, %v737
    %vm749 = vcmask 539648
    %v750 = vsel %vm749, %v748, 0.0
    %751 = vst [vmem:[%s5] sm:$0xff] %v750
    // Predicated region
    $region30: #{simulator_v3_forward.1} parent=1 // pred_check
      _
    $region31: #{simulator_v3_forward.1} parent=1 // pred_check_branch
      %753 = sbr.rel (0) target = $region33
    $region32: #{simulator_v3_forward.1} parent=1 // pred_region
      _
    $region33: #{simulator_v3_forward.1} parent=1 // pred_fallthru
      _
    // Predicated region
    $region34: #{simulator_v3_forward.1} parent=1 // pred_check
      _
    $region35: #{simulator_v3_forward.1} parent=1 // pred_check_branch
      %755 = sbr.rel (0) target = $region37
    $region36: #{simulator_v3_forward.1} parent=1 // pred_region
      _
    $region37: #{simulator_v3_forward.1} parent=1 // pred_fallthru
      _
    %756 = vsyncpa [#allocation3], 1
    %757 = vsyncpa [#allocation5], 1

</llo_original>
